<compile_context>
chip_gen: v6e
topology: v6e:2x2x1
jax: 0.10.0
libtpu: 0.0.40
codegen_flags: <defaults>
</compile_context>

<pallas_src>
import jax
import jax.numpy as jnp
import numpy as np
from jax.experimental import pallas as pl
from jax.experimental.pallas import tpu as pltpu

SEQ_LEN = 24
PRED_LEN = 24
KERNEL_SIZE = 25
HALF = (KERNEL_SIZE - 1) // 2  # 12
LANE = 128


def _moving_avg_matrix(L: int, k: int) -> jnp.ndarray:
    """A[s, t] such that trend[..., t] = sum_s x[..., s] * A[s, t].

    Equivalent to replicate-padding by (k-1)//2 on both sides followed by
    AvgPool1d(kernel_size=k, stride=1, padding=0).
    """
    half = (k - 1) // 2
    A = np.zeros((L, L), dtype=np.float32)
    for t in range(L):
        for j in range(k):
            s = min(max(t - half + j, 0), L - 1)
            A[s, t] += 1.0 / k
    return jnp.asarray(A)


def dlinear_kernel(x_ref, w_ref, b_ref, o_ref):
    # x_ref: (L, TC)        time-major slab; time on sublanes, B*N columns on lanes
    # w_ref: (PRED_LEN, L)  fused operator W_eff^T (grid-invariant, VMEM resident)
    # b_ref: (PRED_LEN, 1)  fused bias             (grid-invariant, VMEM resident)
    # o_ref: (PRED_LEN, TC) lane-dense output tile
    o_ref[...] = (
        jnp.dot(w_ref[...], x_ref[...], preferred_element_type=jnp.float32)
        + b_ref[...]
    ).astype(o_ref.dtype)


def dlinear_forward(history_data, w_seasonal, b_seasonal, w_trend, b_trend,
                    *, col_tile=4096):
    """history_data: (B, L, N, 1) float32 -> prediction (B, N, PRED_LEN)."""
    assert history_data.shape[-1] == 1
    B, L, N, _ = history_data.shape
    assert L == SEQ_LEN

    # --- fold decomposition + both Linear layers into one (L, P) operator -----
    # out = res @ Ws^T + trend @ Wt^T + bs + bt,  trend = x @ A,  res = x - trend
    #     = x @ [Ws^T + A @ (Wt^T - Ws^T)] + (bs + bt)
    A = _moving_avg_matrix(SEQ_LEN, KERNEL_SIZE)                 # (L, L)
    w_eff = w_seasonal.T + A @ (w_trend.T - w_seasonal.T)        # (L, P) tiny XLA work
    w_k = w_eff.T                                                # (P, L): out^T = W_eff^T @ x^T
    b_k = (b_seasonal + b_trend).reshape(PRED_LEN, 1)            # (P, 1)

    # --- lane-dense time-major slab: columns are flattened (b, n) pairs -------
    x = history_data.reshape(B, L, N)                            # drop trailing 1 (free)
    x_t = jnp.transpose(x, (1, 0, 2)).reshape(L, B * N)          # (24, C)

    C = B * N
    tc = min(col_tile, ((C + LANE - 1) // LANE) * LANE)          # lane-aligned column tile
    pad = (-C) % tc
    if pad:
        x_t = jnp.pad(x_t, ((0, 0), (0, pad)))                   # fuses with the transpose
    Cp = C + pad

    out_t = pl.pallas_call(
        dlinear_kernel,
        out_shape=jax.ShapeDtypeStruct((PRED_LEN, Cp), jnp.float32),
        grid=(Cp // tc,),
        in_specs=[
            pl.BlockSpec((L, tc), lambda c: (0, c)),             # streamed input slab
            pl.BlockSpec((PRED_LEN, L), lambda c: (0, 0)),       # resident fused weight
            pl.BlockSpec((PRED_LEN, 1), lambda c: (0, 0)),       # resident fused bias
        ],
        out_specs=pl.BlockSpec((PRED_LEN, tc), lambda c: (0, c)),
        compiler_params=pltpu.CompilerParams(
            dimension_semantics=("parallel",),                   # shards across v7x's 2 TCs
        ),
    )(x_t, w_k, b_k)

    # (P, B*N) -> (B, N, P), matching the PyTorch module's output layout.
    out = out_t[:, :C].reshape(PRED_LEN, B, N).transpose(1, 2, 0)
    return out


def dlinear_reference(history_data, w_seasonal, b_seasonal, w_trend, b_trend):
    """Pure-JAX mirror of the PyTorch forward for verification."""
    x = history_data[..., 0]                              # (B, L, N)
    front = jnp.repeat(x[:, 0:1, :], HALF, axis=1)
    end = jnp.repeat(x[:, -1:, :], HALF, axis=1)
    xp = jnp.concatenate([front, x, end], axis=1)         # (B, L + 2*HALF, N)
    trend = jnp.stack(
        [xp[:, t:t + KERNEL_SIZE, :].mean(axis=1) for t in range(SEQ_LEN)], axis=1
    )                                                     # (B, L, N)
    res = x - trend
    seasonal_init = res.transpose(0, 2, 1)                # (B, N, L)
    trend_init = trend.transpose(0, 2, 1)                 # (B, N, L)
    seasonal_out = seasonal_init @ w_seasonal.T + b_seasonal
    trend_out = trend_init @ w_trend.T + b_trend
    return seasonal_out + trend_out                       # (B, N, PRED_LEN)


if __name__ == "__main__":
    key = jax.random.PRNGKey(0)
    k_x, k_ws, k_bs, k_wt, k_bt = jax.random.split(key, 5)

    B, N = 2, 4
    history_data = jax.random.normal(k_x, (B, SEQ_LEN, N, 1), dtype=jnp.float32)

    # Deterministic parameter init (nn.Linear-style uniform bound 1/sqrt(in_features)).
    bound = 1.0 / np.sqrt(SEQ_LEN)
    w_seasonal = jax.random.uniform(k_ws, (PRED_LEN, SEQ_LEN), jnp.float32, -bound, bound)
    b_seasonal = jax.random.uniform(k_bs, (PRED_LEN,), jnp.float32, -bound, bound)
    w_trend = jax.random.uniform(k_wt, (PRED_LEN, SEQ_LEN), jnp.float32, -bound, bound)
    b_trend = jax.random.uniform(k_bt, (PRED_LEN,), jnp.float32, -bound, bound)

    out = dlinear_forward(history_data, w_seasonal, b_seasonal, w_trend, b_trend)
    out = jax.block_until_ready(out)

    ref = dlinear_reference(history_data, w_seasonal, b_seasonal, w_trend, b_trend)
    # Fusion into W_eff changes f32 accumulation order slightly -> marginally looser rtol.
    np.testing.assert_allclose(np.asarray(out), np.asarray(ref), rtol=1e-4, atol=1e-5)

    print("KERNEL_OK")
</pallas_src>

<mosaic_0001>
module attributes {stable_mosaic.version = 11 : i64} {
  func.func @dlinear_kernel(%arg0: i32, %arg1: memref<24x128xf32, #tpu.memory_space<vmem>>, %arg2: memref<24x24xf32, #tpu.memory_space<vmem>>, %arg3: memref<24x1xf32, #tpu.memory_space<vmem>>, %arg4: memref<24x128xf32, #tpu.memory_space<vmem>>) attributes {dimension_semantics = [#tpu.dimension_semantics<parallel>], iteration_bounds = array<i64: 1>, scalar_prefetch = 0 : i64, scratch_operands = 0 : i64, tpu.core_type = #tpu.core_type<tc>, window_params = [{transform_indices = @transform_0, window_bounds = array<i64: 24, 128>}, {pipeline_mode = #tpu.pipeline_mode<synchronous>, transform_indices = @transform_1, window_bounds = array<i64: 24, 24>}, {pipeline_mode = #tpu.pipeline_mode<synchronous>, transform_indices = @transform_2, window_bounds = array<i64: 24, 1>}, {transform_indices = @transform_3, window_bounds = array<i64: 24, 128>}]} {
    %c0 = arith.constant 0 : index
    %c0_0 = arith.constant 0 : index
    %0 = vector.load %arg2[%c0, %c0_0] : memref<24x24xf32, #tpu.memory_space<vmem>>, vector<24x24xf32>
    %c0_1 = arith.constant 0 : index
    %c0_2 = arith.constant 0 : index
    %1 = vector.load %arg1[%c0_1, %c0_2] : memref<24x128xf32, #tpu.memory_space<vmem>>, vector<24x128xf32>
    %cst = arith.constant dense<0.000000e+00> : vector<24x128xf32>
    %2 = tpu.matmul %0, %1, %cst {dimension_numbers = #tpu.dot_dimension_numbers<[1], [0], [0], [1], [0, 0, 1, 1], [], []>} : vector<24x24xf32>, vector<24x128xf32>, vector<24x128xf32> -> vector<24x128xf32>
    %c0_3 = arith.constant 0 : index
    %c0_4 = arith.constant 0 : index
    %3 = vector.load %arg3[%c0_3, %c0_4] : memref<24x1xf32, #tpu.memory_space<vmem>>, vector<24x1xf32>
    %4 = vector.broadcast %3 : vector<24x1xf32> to vector<24x128xf32>
    %5 = arith.addf %2, %4 : vector<24x128xf32>
    %c0_5 = arith.constant 0 : index
    %c0_6 = arith.constant 0 : index
    %6 = vector.load %arg4[%c0_5, %c0_6] : memref<24x128xf32, #tpu.memory_space<vmem>>, vector<24x128xf32>
    tpu.vector_store %arg4[%c0_5, %c0_6], %5 {strides = array<i32>} : memref<24x128xf32, #tpu.memory_space<vmem>>, vector<24x128xf32>,
    return
  }
  func.func @transform_0(%arg0: i32) -> (i32, i32) {
    %c0_i32 = arith.constant 0 : i32
    %c0_i32_0 = arith.constant 0 : i32
    return %c0_i32, %arg0 : i32, i32
  }
  func.func @transform_1(%arg0: i32) -> (i32, i32) {
    %c0_i32 = arith.constant 0 : i32
    %c0_i32_0 = arith.constant 0 : i32
    %c0_i32_1 = arith.constant 0 : i32
    return %c0_i32, %c0_i32_0 : i32, i32
  }
  func.func @transform_2(%arg0: i32) -> (i32, i32) {
    %c0_i32 = arith.constant 0 : i32
    %c0_i32_0 = arith.constant 0 : i32
    %c0_i32_1 = arith.constant 0 : i32
    return %c0_i32, %c0_i32_0 : i32, i32
  }
  func.func @transform_3(%arg0: i32) -> (i32, i32) {
    %c0_i32 = arith.constant 0 : i32
    %c0_i32_0 = arith.constant 0 : i32
    return %c0_i32, %arg0 : i32, i32
  }
}

</mosaic_0001>

<llo_original>
// kernel: tpu_custom_call.1
$region0: #{tpu_custom_call.1}
  #allocation0 [shape = 'u32[]', space=smem, size = 0x4, offset = 0x4, fixed_abs, tag = 'smem constant byte address 0x4 - core index']
  #allocation1 [shape = 'u32[144,128]{1,0:T(1,128)}', space=vmem, size = 0x12000, scoped, tag = 'internal scratch']
  %s0 = inlined_call_operand.vmem [shape: f32[24,128], index: 0, kind: input, shape index: {}]
  %s1 = inlined_call_operand.hbm [shape: f32[24,24], index: 1, kind: input, shape index: {}]
  %s2 = inlined_call_operand.vmem [shape: f32[24,1], index: 2, kind: input, shape index: {}]
  %s3 = inlined_call_operand.hbm [shape: f32[24,128], index: 3, kind: output, shape index: {}]
  %s4 = sld [smem:[#allocation0]]
  $region26: #{tpu_custom_call.1} parent=0
    _
  %s6 = ssub.s32 1, %s4
  %s7 = scalar_select 0, %s6, %s4
  $region1: #{tpu_custom_call.1} parent=0
    #allocation2 [shape = 'u8[12288]{0}', space=vmem, size = 0x3000, scoped, tag = 'input window, operand 1, single buffered']
    #allocation3 [shape = 's32[1]{0}', space=sflag, size = 0x4, scoped, tag = 'scoped memory for tpu_custom_call.1']
    #allocation4 [shape = 's32[1]{0}', space=sflag, size = 0x4, scoped, tag = 'scoped memory for tpu_custom_call.1']
    #allocation5 [shape = 'u8[12288]{0}', space=vmem, size = 0x3000, scoped, tag = 'output window, operand 0, single buffered']
    %8 = vsyncpa [#allocation3], 0
    %9 = vsyncpa [#allocation4], 0
    // Predicated region
    $region2: #{tpu_custom_call.1} parent=1 // pred_check
      _
    $region3: #{tpu_custom_call.1} parent=1 // pred_check_branch
      %11 = sbr.rel (0) target = $region5
    $region4: #{tpu_custom_call.1} parent=1 // pred_region
      _
    $region5: #{tpu_custom_call.1} parent=1 // pred_fallthru
      _
    // Predicated region
    $region6: #{tpu_custom_call.1} parent=1 // pred_check
      _
    $region7: #{tpu_custom_call.1} parent=1 // pred_check_branch
      %13 = sbr.rel (0) target = $region9
    $region8: #{tpu_custom_call.1} parent=1 // pred_region
      %s15 = ssub.s32 384, 384
      %16 = vsyncadd [#allocation3], %s15
      %s17 = sshll.u32 [#allocation2], 4
      %s18 = int_to_ptr.vmem [resolvable:$true] %s17
      %23 = dma.hbm_to_vmem [thread:$0]  %s1, 384, %s18, [#allocation3], 128, 128, 8
    $region9: #{tpu_custom_call.1} parent=1 // pred_fallthru
      _
    // Predicated region
    $region10: #{tpu_custom_call.1} parent=1 // pred_check
      _
    $region11: #{tpu_custom_call.1} parent=1 // pred_check_branch
      %25 = sbr.rel (0) target = $region13
    $region12: #{tpu_custom_call.1} parent=1 // pred_region
      _
    $region13: #{tpu_custom_call.1} parent=1 // pred_fallthru
      _
    // Predicated region
    $region14: #{tpu_custom_call.1} parent=1 // pred_check
      _
    $region15: #{tpu_custom_call.1} parent=1 // pred_check_branch
      %27 = sbr.rel (0) target = $region17
    $region16: #{tpu_custom_call.1} parent=1 // pred_region
      %28 = dma.done [#allocation3], 384
    $region17: #{tpu_custom_call.1} parent=1 // pred_fallthru
      _
    %v29 = vld [vmem:[#allocation2] sm:$0xff]
    %v30 = vld [vmem:[#allocation2 + $0x8] sm:$0xff]
    %v31 = vld [vmem:[#allocation2 + $0x10] sm:$0xff]
    %v32 = vld [vmem:[%s0] sm:$0xff]
    %v33 = vld [vmem:[%s0 + $0x8] sm:$0xff]
    %v34 = vld [vmem:[%s0 + $0x10] sm:$0xff]
    %v35 = vld [vmem:[%s2] sm:$0xff]
    %v36 = vld [vmem:[%s2 + $0x8] sm:$0xff]
    %v37 = vld [vmem:[%s2 + $0x10] sm:$0xff]
    %39 = vset.pattern.permute.xlu0 0
    %40 = vperm.xlu0 %39, %v35
    %v41 = vpop.permute.xlu0 %40
    %44 = vset.pattern.permute.xlu0 0
    %45 = vperm.xlu0 %44, %v36
    %v46 = vpop.permute.xlu0 %45
    %49 = vset.pattern.permute.xlu0 0
    %50 = vperm.xlu0 %49, %v37
    %v51 = vpop.permute.xlu0 %50
    %vm53 = vcmask 195584
    %v55 = vsel %vm53, %v29, 0
    %v58 = vsel %vm53, %v30, 0
    %v61 = vsel %vm53, %v31, 0
    %63 = vmatprep.subr.mxu0 0.0
    %64 = vmatpush1.msra.mxu0 0.0
    %65 = vmatprep.subr.mxu0 0.0
    %66 = vmatpush1.msra.mxu0 0.0
    %67 = vmatprep.subr.mxu0 0.0
    %68 = vmatpush1.msra.mxu0 0.0
    %69 = vmatprep.subr.mxu0 0.0
    %70 = vmatpush1.msra.mxu0 0.0
    %71 = vmatprep.subr.mxu0 0.0
    %72 = vmatpush1.msra.mxu0 0.0
    %73 = vmatprep.subr.mxu0 0.0
    %74 = vmatpush1.msra.mxu0 0.0
    %75 = vmatprep.subr.mxu0 0.0
    %76 = vmatpush1.msra.mxu0 0.0
    %77 = vmatprep.subr.mxu0 0.0
    %78 = vmatpush1.msra.mxu0 0.0
    %79 = vmatprep.subr.mxu0 0.0
    %80 = vmatpush1.msra.mxu0 0.0
    %81 = vmatprep.subr.mxu0 0.0
    %82 = vmatpush1.msra.mxu0 0.0
    %83 = vmatprep.subr.mxu0 0.0
    %84 = vmatpush1.msra.mxu0 0.0
    %85 = vmatprep.subr.mxu0 0.0
    %86 = vmatpush1.msra.mxu0 0.0
    %87 = vmatprep.subr.mxu0 0.0
    %88 = vmatpush1.msra.mxu0 0.0
    %89 = vmatprep.subr.mxu0 0.0
    %90 = vmatpush1.msra.mxu0 %v34
    %91 = vmatprep.subr.mxu0 0.0
    %92 = vmatpush1.msra.mxu0 %v33
    %93 = vmatprep.subr.mxu0 0.0
    %94 = vmatpush1.msra.mxu0 %v32
    %95 = vmatprep.subr.mxu0 0.0
    %96 = vmatpush2.msra.mxu0 0.0
    %97 = vmatprep.subr.mxu0 0.0
    %98 = vmatpush2.msra.mxu0 0.0
    %99 = vmatprep.subr.mxu0 0.0
    %100 = vmatpush2.msra.mxu0 0.0
    %101 = vmatprep.subr.mxu0 0.0
    %102 = vmatpush2.msra.mxu0 0.0
    %103 = vmatprep.subr.mxu0 0.0
    %104 = vmatpush2.msra.mxu0 0.0
    %105 = vmatprep.subr.mxu0 0.0
    %106 = vmatpush2.msra.mxu0 0.0
    %107 = vmatprep.subr.mxu0 0.0
    %108 = vmatpush2.msra.mxu0 0.0
    %109 = vmatprep.subr.mxu0 0.0
    %110 = vmatpush2.msra.mxu0 0.0
    %111 = vmatprep.subr.mxu0 0.0
    %112 = vmatpush2.msra.mxu0 0.0
    %113 = vmatprep.subr.mxu0 0.0
    %114 = vmatpush2.msra.mxu0 0.0
    %115 = vmatprep.subr.mxu0 0.0
    %116 = vmatpush2.msra.mxu0 0.0
    %117 = vmatprep.subr.mxu0 0.0
    %118 = vmatpush2.msra.mxu0 0.0
    %119 = vmatprep.subr.mxu0 0.0
    %120 = vmatpush2.msra.mxu0 0.0
    %121 = vmatprep.subr.mxu0 0.0
    %122 = vmatpush2.msra.mxu0 0.0
    %123 = vmatprep.subr.mxu0 0.0
    %124 = vmatpush2.msra.mxu0 0.0
    %125 = vmatprep.subr.mxu0 0.0
    %126 = vmatpush2.msra.mxu0 0.0
    %127 = vmatprep.mubr.f32.mxu0 0.0
    %128 = vmatmul.mubr.f32.gmra.mxu0 %v55
    %v129 = vpop.f32.mrf.mxu0
    %v130 = vadd.f32 %v41, %v129
    %v131 = vpop.f32.mrf.mxu0
    %132 = vmatprep.mubr.f32.mxu0 0.0
    %133 = vmatmul.mubr.f32.gmra.mxu0 %v58
    %v134 = vpop.f32.mrf.mxu0
    %v135 = vadd.f32 %v46, %v134
    %v136 = vpop.f32.mrf.mxu0
    %137 = vmatprep.mubr.f32.mxu0 0.0
    %138 = vmatmul.mubr.f32.gmra.mxu0 %v61
    %v139 = vpop.f32.mrf.mxu0
    %v140 = vadd.f32 %v51, %v139
    %v141 = vpop.f32.mrf.mxu0
    %142 = vdwg.mxu0
    %143 = vst [vmem:[#allocation5] sm:$0xff] %v130
    %144 = vst [vmem:[#allocation5 + $0x8] sm:$0xff] %v135
    %145 = vst [vmem:[#allocation5 + $0x10] sm:$0xff] %v140
    // Predicated region
    $region18: #{tpu_custom_call.1} parent=1 // pred_check
      _
    $region19: #{tpu_custom_call.1} parent=1 // pred_check_branch
      %147 = sbr.rel (0) target = $region21
    $region20: #{tpu_custom_call.1} parent=1 // pred_region
      %s149 = ssub.s32 384, 384
      %150 = vsyncadd [#allocation4], %s149
      %s151 = sshll.u32 [#allocation5], 4
      %s152 = int_to_ptr.vmem [resolvable:$true] %s151
      %157 = dma.vmem_to_hbm [thread:$0]  %s152, 384, %s3, [#allocation4], 128, 128, 8
    $region21: #{tpu_custom_call.1} parent=1 // pred_fallthru
      _
    // Predicated region
    $region22: #{tpu_custom_call.1} parent=1 // pred_check
      _
    $region23: #{tpu_custom_call.1} parent=1 // pred_check_branch
      %159 = sbr.rel (0) target = $region25
    $region24: #{tpu_custom_call.1} parent=1 // pred_region
      %160 = dma.done [#allocation4], 384
    $region25: #{tpu_custom_call.1} parent=1 // pred_fallthru
      _
    %161 = vsyncpa [#allocation3], 1
    %162 = vsyncpa [#allocation4], 1

</llo_original>
